<compile_context>
chip_gen: v7x
topology: tpu7x:2x2x1
jax: 0.10.0
libtpu: 0.0.40
codegen_flags: <defaults>
</compile_context>

<pallas_src>
import functools
import math

import jax
import jax.numpy as jnp
from jax.experimental import pallas as pl
from jax.experimental.pallas import tpu as pltpu

_LANE = 128
_VMEM_LIMIT = 64 * 1024 * 1024


def _round_up(a, b):
    return (a + b - 1) // b * b


# ---------------------------------------------------------------------------
# Kernel 1: support = x @ W   (computed ONCE; bf16 result for cheap streaming)
# ---------------------------------------------------------------------------
def _support_kernel(x_ref, w_ref, o_ref):
    o_ref[...] = jnp.dot(
        x_ref[...], w_ref[...], preferred_element_type=jnp.float32
    ).astype(o_ref.dtype)


# ---------------------------------------------------------------------------
# Kernel 2: out = adj @ support (+ bias).  grid = (row tiles, K tiles).
# Output block index_map is (i, 0) -> constant over k, so the f32 output
# block stays VMEM-resident across the reduction and we accumulate into it
# directly.
# ---------------------------------------------------------------------------
def _make_adj_kernel(has_bias):
    def kernel(adj_ref, s_ref, *rest):
        if has_bias:
            b_ref, o_ref = rest
        else:
            (o_ref,) = rest
            b_ref = None

        k = pl.program_id(1)

        @pl.when(k == 0)
        def _():
            if b_ref is not None:
                o_ref[...] = jnp.broadcast_to(b_ref[...], o_ref.shape)
            else:
                o_ref[...] = jnp.zeros_like(o_ref)

        # acc += adj[i_tile, k_tile] @ support[k_tile]   (MXU, bf16 in / f32 acc)
        o_ref[...] += jnp.dot(
            adj_ref[...], s_ref[...], preferred_element_type=jnp.float32
        )

    return kernel


def _gcn_forward(x, adj, weight, bias, *, tm, tk):
    n, f_in = x.shape
    f_out = weight.shape[1]
    f_out_p = _round_up(f_out, _LANE)      # lane-dense output (unmasked vst)

    n_m_p = _round_up(n, tm)               # padded output / adj rows
    n_k_p = _round_up(n, tk)               # padded contraction (adj cols, support rows)

    # bf16 inputs (kernel is adj-HBM-bandwidth bound); zero padding keeps the
    # reduction exact and padded output rows are sliced off below.
    x_p = jnp.zeros((n_k_p, f_in), jnp.bfloat16).at[:n, :].set(
        x.astype(jnp.bfloat16))
    adj_p = jnp.zeros((n_m_p, n_k_p), jnp.bfloat16).at[:n, :n].set(
        adj.astype(jnp.bfloat16))
    w_p = jnp.zeros((f_in, f_out_p), jnp.bfloat16).at[:, :f_out].set(
        weight.astype(jnp.bfloat16))

    # --- Pass 1: support = x @ W, computed once (hoisted out of the k loop).
    support = pl.pallas_call(
        _support_kernel,
        out_shape=jax.ShapeDtypeStruct((n_k_p, f_out_p), jnp.bfloat16),
        grid_spec=pltpu.PrefetchScalarGridSpec(
            num_scalar_prefetch=0,
            grid=(n_k_p // tk,),
            in_specs=[
                pl.BlockSpec((tk, f_in), lambda i: (i, 0)),
                pl.BlockSpec((f_in, f_out_p), lambda i: (0, 0)),  # W resident
            ],
            out_specs=pl.BlockSpec((tk, f_out_p), lambda i: (i, 0)),
        ),
        compiler_params=pltpu.CompilerParams(
            dimension_semantics=("parallel",),
            vmem_limit_bytes=_VMEM_LIMIT,
        ),
        cost_estimate=pl.CostEstimate(
            flops=2 * n_k_p * f_in * f_out_p,
            transcendentals=0,
            bytes_accessed=(n_k_p * f_in * 2
                            + f_in * f_out_p * 2
                            + n_k_p * f_out_p * 2),
        ),
    )(x_p, w_p)

    # --- Pass 2: out = adj @ support (+ bias); adj is the dominant HBM stream.
    has_bias = bias is not None
    inputs = [adj_p, support]
    in_specs = [
        pl.BlockSpec((tm, tk), lambda i, k: (i, k)),        # adj tile (streamed)
        pl.BlockSpec((tk, f_out_p), lambda i, k: (k, 0)),   # support K tile
    ]
    if has_bias:
        b_p = jnp.zeros((1, f_out_p), jnp.float32).at[:, :f_out].set(
            jnp.asarray(bias, jnp.float32).reshape(1, f_out))
        inputs.append(b_p)
        in_specs.append(pl.BlockSpec((1, f_out_p), lambda i, k: (0, 0)))

    n_row_tiles = n_m_p // tm
    n_k_tiles = n_k_p // tk

    out = pl.pallas_call(
        _make_adj_kernel(has_bias),
        out_shape=jax.ShapeDtypeStruct((n_m_p, f_out_p), jnp.float32),
        grid_spec=pltpu.PrefetchScalarGridSpec(
            num_scalar_prefetch=0,
            grid=(n_row_tiles, n_k_tiles),
            in_specs=in_specs,
            out_specs=pl.BlockSpec((tm, f_out_p), lambda i, k: (i, 0)),
        ),
        compiler_params=pltpu.CompilerParams(
            dimension_semantics=("parallel", "arbitrary"),
            vmem_limit_bytes=_VMEM_LIMIT,
        ),
        cost_estimate=pl.CostEstimate(
            flops=2 * n_m_p * n_k_p * f_out_p,
            transcendentals=0,
            bytes_accessed=(n_m_p * n_k_p * 2                       # adj once
                            + n_row_tiles * n_k_p * f_out_p * 2     # support re-read
                            + n_m_p * f_out_p * 4),                 # output
        ),
    )(*inputs)

    return out[:n, :f_out]


@functools.partial(jax.jit, static_argnames=("tm", "tk"))
def _gcn_forward_jit(x, adj, weight, bias, *, tm, tk):
    return _gcn_forward(x, adj, weight, bias, tm=tm, tk=tk)


def graph_convolution(x, adj, weight, bias=None, *, block_m=512, block_k=1024):
    """GraphConvolution forward: adj @ (x @ weight) [+ bias].

    x:      [N, in_features]
    adj:    [N, N]
    weight: [in_features, out_features]
    bias:   [out_features] or None
    returns [N, out_features] float32
    """
    n = x.shape[0]
    n_128 = _round_up(n, _LANE)
    # Tile sizes (multiples of 128); shrink adaptively for small graphs.
    tm = min(block_m, n_128)
    tk = min(block_k, n_128)
    return _gcn_forward_jit(x, adj, weight, bias, tm=tm, tk=tk)


def init_params(key, in_features, out_features, use_bias=True):
    """Deterministic init mirroring GraphConvolution.reset_parameters."""
    k_w, k_b = jax.random.split(key)
    # xavier_uniform_ with linear gain (=1): bound = sqrt(6 / (fan_in + fan_out))
    bound = math.sqrt(6.0 / (in_features + out_features))
    weight = jax.random.uniform(
        k_w, (in_features, out_features), jnp.float32, minval=-bound, maxval=bound
    )
    if use_bias:
        stdv = 2.0 / math.sqrt(out_features)
        bias = jax.random.uniform(
            k_b, (out_features,), jnp.float32, minval=-stdv, maxval=stdv
        )
    else:
        bias = None
    return weight, bias


if __name__ == "__main__":
    key = jax.random.PRNGKey(0)
    k_x, k_adj, k_p = jax.random.split(key, 3)

    N = 8              # number of graph nodes (small demo; tiles auto-shrink)
    IN_FEATURES = 16
    OUT_FEATURES = 32

    x = jax.random.normal(k_x, (N, IN_FEATURES), dtype=jnp.float32)
    # Simple symmetric, row-normalized adjacency (deterministic).
    adj_raw = (jax.random.uniform(k_adj, (N, N)) > 0.5).astype(jnp.float32)
    adj_sym = jnp.maximum(adj_raw, adj_raw.T) + jnp.eye(N, dtype=jnp.float32)
    adj = adj_sym / jnp.sum(adj_sym, axis=1, keepdims=True)

    weight, bias = init_params(k_p, IN_FEATURES, OUT_FEATURES, use_bias=True)

    out = graph_convolution(x, adj, weight, bias)
    out = jax.block_until_ready(out)

    # Reference (plain f32 JAX, same math as the torch module).  Tolerance
    # accounts for the intentional bf16 input/intermediate casts in the kernel.
    ref = adj @ (x @ weight) + bias[None, :]
    assert out.shape == (N, OUT_FEATURES)
    assert jnp.allclose(out, ref, atol=5e-2, rtol=5e-2), (
        float(jnp.max(jnp.abs(out - ref)))
    )

    # Also exercise the no-bias kernel variant.
    out_nb = jax.block_until_ready(graph_convolution(x, adj, weight, None))
    ref_nb = adj @ (x @ weight)
    assert jnp.allclose(out_nb, ref_nb, atol=5e-2, rtol=5e-2)

    print("KERNEL_OK")
</pallas_src>

<mosaic_0001>
module attributes {stable_mosaic.version = 11 : i64} {
  func.func @_support_kernel(%arg0: i32, %arg1: memref<128x16xbf16, #tpu.memory_space<vmem>>, %arg2: memref<16x128xbf16, #tpu.memory_space<vmem>>, %arg3: memref<128x128xbf16, #tpu.memory_space<vmem>>) attributes {dimension_semantics = [#tpu.dimension_semantics<parallel>], iteration_bounds = array<i64: 1>, scalar_prefetch = 0 : i64, scratch_operands = 0 : i64, tpu.core_type = #tpu.core_type<tc>, window_params = [{transform_indices = @transform_0, window_bounds = array<i64: 128, 16>}, {pipeline_mode = #tpu.pipeline_mode<synchronous>, transform_indices = @transform_1, window_bounds = array<i64: 16, 128>}, {transform_indices = @transform_2, window_bounds = array<i64: 128, 128>}]} {
    %c0 = arith.constant 0 : index
    %c0_0 = arith.constant 0 : index
    %0 = vector.load %arg1[%c0, %c0_0] : memref<128x16xbf16, #tpu.memory_space<vmem>>, vector<128x16xbf16>
    %c0_1 = arith.constant 0 : index
    %c0_2 = arith.constant 0 : index
    %1 = vector.load %arg2[%c0_1, %c0_2] : memref<16x128xbf16, #tpu.memory_space<vmem>>, vector<16x128xbf16>
    %cst = arith.constant dense<0.000000e+00> : vector<128x128xf32>
    %2 = tpu.matmul %0, %1, %cst {dimension_numbers = #tpu.dot_dimension_numbers<[1], [0], [0], [1], [0, 0, 1, 1], [], []>} : vector<128x16xbf16>, vector<16x128xbf16>, vector<128x128xf32> -> vector<128x128xf32>
    %3 = arith.truncf %2 : vector<128x128xf32> to vector<128x128xbf16>
    %c0_3 = arith.constant 0 : index
    %c0_4 = arith.constant 0 : index
    %4 = vector.load %arg3[%c0_3, %c0_4] : memref<128x128xbf16, #tpu.memory_space<vmem>>, vector<128x128xbf16>
    tpu.vector_store %arg3[%c0_3, %c0_4], %3 {strides = array<i32>} : memref<128x128xbf16, #tpu.memory_space<vmem>>, vector<128x128xbf16>,
    return
  }
  func.func @transform_0(%arg0: i32) -> (i32, i32) {
    %c0_i32 = arith.constant 0 : i32
    %c0_i32_0 = arith.constant 0 : i32
    return %arg0, %c0_i32 : i32, i32
  }
  func.func @transform_1(%arg0: i32) -> (i32, i32) {
    %c0_i32 = arith.constant 0 : i32
    %c0_i32_0 = arith.constant 0 : i32
    %c0_i32_1 = arith.constant 0 : i32
    return %c0_i32, %c0_i32_0 : i32, i32
  }
  func.func @transform_2(%arg0: i32) -> (i32, i32) {
    %c0_i32 = arith.constant 0 : i32
    %c0_i32_0 = arith.constant 0 : i32
    return %arg0, %c0_i32 : i32, i32
  }
}

module attributes {stable_mosaic.version = 11 : i64} {
  func.func @kernel(%arg0: i32, %arg1: i32, %arg2: memref<128x128xbf16, #tpu.memory_space<vmem>>, %arg3: memref<128x128xbf16, #tpu.memory_space<vmem>>, %arg4: memref<1x128xf32, #tpu.memory_space<vmem>>, %arg5: memref<128x128xf32, #tpu.memory_space<vmem>>) attributes {dimension_semantics = [#tpu.dimension_semantics<parallel>, #tpu.dimension_semantics<arbitrary>], iteration_bounds = array<i64: 1, 1>, scalar_prefetch = 0 : i64, scratch_operands = 0 : i64, tpu.core_type = #tpu.core_type<tc>, window_params = [{transform_indices = @transform_0, window_bounds = array<i64: 128, 128>}, {transform_indices = @transform_1, window_bounds = array<i64: 128, 128>}, {pipeline_mode = #tpu.pipeline_mode<synchronous>, transform_indices = @transform_2, window_bounds = array<i64: 1, 128>}, {transform_indices = @transform_3, window_bounds = array<i64: 128, 128>}]} {
    %c0_i32 = arith.constant 0 : i32
    %0 = arith.cmpi eq, %arg1, %c0_i32 : i32
    %1 = arith.extui %0 : i1 to i32
    %c0_i32_0 = arith.constant 0 : i32
    %2 = arith.cmpi ne, %1, %c0_i32_0 : i32
    scf.if %2 {
      %c0_8 = arith.constant 0 : index
      %c0_9 = arith.constant 0 : index
      %9 = vector.load %arg4[%c0_8, %c0_9] : memref<1x128xf32, #tpu.memory_space<vmem>>, vector<1x128xf32>
      %10 = vector.shape_cast %9 : vector<1x128xf32> to vector<1x128xf32>
      %11 = vector.broadcast %10 : vector<1x128xf32> to vector<128x128xf32>
      %c0_10 = arith.constant 0 : index
      %c0_11 = arith.constant 0 : index
      %12 = vector.load %arg5[%c0_10, %c0_11] : memref<128x128xf32, #tpu.memory_space<vmem>>, vector<128x128xf32>
      tpu.vector_store %arg5[%c0_10, %c0_11], %11 {strides = array<i32>} : memref<128x128xf32, #tpu.memory_space<vmem>>, vector<128x128xf32>,
    } else {
    }
    %c0 = arith.constant 0 : index
    %c0_1 = arith.constant 0 : index
    %3 = vector.load %arg5[%c0, %c0_1] : memref<128x128xf32, #tpu.memory_space<vmem>>, vector<128x128xf32>
    %c0_2 = arith.constant 0 : index
    %c0_3 = arith.constant 0 : index
    %4 = vector.load %arg2[%c0_2, %c0_3] : memref<128x128xbf16, #tpu.memory_space<vmem>>, vector<128x128xbf16>
    %c0_4 = arith.constant 0 : index
    %c0_5 = arith.constant 0 : index
    %5 = vector.load %arg3[%c0_4, %c0_5] : memref<128x128xbf16, #tpu.memory_space<vmem>>, vector<128x128xbf16>
    %cst = arith.constant dense<0.000000e+00> : vector<128x128xf32>
    %6 = tpu.matmul %4, %5, %cst {dimension_numbers = #tpu.dot_dimension_numbers<[1], [0], [0], [1], [0, 0, 1, 1], [], []>} : vector<128x128xbf16>, vector<128x128xbf16>, vector<128x128xf32> -> vector<128x128xf32>
    %7 = arith.addf %3, %6 : vector<128x128xf32>
    %c0_6 = arith.constant 0 : index
    %c0_7 = arith.constant 0 : index
    %8 = vector.load %arg5[%c0_6, %c0_7] : memref<128x128xf32, #tpu.memory_space<vmem>>, vector<128x128xf32>
    tpu.vector_store %arg5[%c0_6, %c0_7], %7 {strides = array<i32>} : memref<128x128xf32, #tpu.memory_space<vmem>>, vector<128x128xf32>,
    return
  }
  func.func @transform_0(%arg0: i32, %arg1: i32) -> (i32, i32) {
    %c0_i32 = arith.constant 0 : i32
    return %arg0, %arg1 : i32, i32
  }
  func.func @transform_1(%arg0: i32, %arg1: i32) -> (i32, i32) {
    %c0_i32 = arith.constant 0 : i32
    %c0_i32_0 = arith.constant 0 : i32
    return %arg1, %c0_i32 : i32, i32
  }
  func.func @transform_2(%arg0: i32, %arg1: i32) -> (i32, i32) {
    %c0_i32 = arith.constant 0 : i32
    %c0_i32_0 = arith.constant 0 : i32
    %c0_i32_1 = arith.constant 0 : i32
    return %c0_i32, %c0_i32_0 : i32, i32
  }
  func.func @transform_3(%arg0: i32, %arg1: i32) -> (i32, i32) {
    %c0_i32 = arith.constant 0 : i32
    %c0_i32_0 = arith.constant 0 : i32
    return %arg0, %c0_i32 : i32, i32
  }
}

</mosaic_0001>

<llo_original>
// kernel: _gcn_forward_jit.3
$region0: #{_gcn_forward_jit.3}
  #allocation0 [shape = 'u32[]', space=smem, size = 0x4, offset = 0x4, fixed_abs, tag = 'smem constant byte address 0x4 - core index']
  #allocation1 [shape = 'u32[144,128]{1,0:T(1,128)}', space=vmem, size = 0x12000, scoped, tag = 'internal scratch']
  %s0 = inlined_call_operand.hbm [shape: bf16[128,128], index: 0, kind: input, shape index: {}]
  %s1 = inlined_call_operand.hbm [shape: bf16[128,128], index: 1, kind: input, shape index: {}]
  %s2 = inlined_call_operand.hbm [shape: f32[1,128], index: 2, kind: input, shape index: {}]
  %s3 = inlined_call_operand.hbm [shape: f32[128,128], index: 3, kind: output, shape index: {}]
  %s4 = sld [smem:[#allocation0]]
  $region38: #{_gcn_forward_jit.3} parent=0
    _
  %s6 = ssub.s32 1, %s4
  %s7 = scalar_select 0, %s6, %s4
  $region1: #{_gcn_forward_jit.3} parent=0
    #allocation2 [shape = 'u8[32768]{0}', space=vmem, size = 0x8000, scoped, tag = 'input window, operand 0, single buffered']
    #allocation3 [shape = 's32[1]{0}', space=sflag, size = 0x4, scoped, tag = 'scoped memory for _gcn_forward_jit.3']
    #allocation4 [shape = 's32[1]{0}', space=sflag, size = 0x4, scoped, tag = 'scoped memory for _gcn_forward_jit.3']
    #allocation5 [shape = 'u8[32768]{0}', space=vmem, size = 0x8000, scoped, tag = 'input window, operand 1, single buffered']
    #allocation6 [shape = 's32[1]{0}', space=sflag, size = 0x4, scoped, tag = 'scoped memory for _gcn_forward_jit.3']
    #allocation7 [shape = 'u8[512]{0}', space=vmem, size = 0x400, scoped, tag = 'input window, operand 2, single buffered']
    #allocation8 [shape = 'u8[65536]{0}', space=vmem, size = 0x10000, scoped, tag = 'output window, operand 0, single buffered']
    %8 = vsyncpa [#allocation3], 0
    %9 = vsyncpa [#allocation6], 0
    %10 = vsyncpa [#allocation4], 0
    // Predicated region
    $region2: #{_gcn_forward_jit.3} parent=1 // pred_check
      _
    $region3: #{_gcn_forward_jit.3} parent=1 // pred_check_branch
      %12 = sbr.rel (0) target = $region5
    $region4: #{_gcn_forward_jit.3} parent=1 // pred_region
      %s14 = ssub.s32 1024, 1024
      %15 = vsyncadd [#allocation3], %s14
      %s16 = sshll.u32 [#allocation2], 4
      %s17 = int_to_ptr.vmem [resolvable:$true] %s16
      %22 = dma.hbm_to_vmem [thread:$0]  %s0, 1024, %s17, [#allocation3], 64, 64, 4
    $region5: #{_gcn_forward_jit.3} parent=1 // pred_fallthru
      _
    // Predicated region
    $region6: #{_gcn_forward_jit.3} parent=1 // pred_check
      _
    $region7: #{_gcn_forward_jit.3} parent=1 // pred_check_branch
      %24 = sbr.rel (0) target = $region9
    $region8: #{_gcn_forward_jit.3} parent=1 // pred_region
      %s26 = ssub.s32 1024, 1024
      %27 = vsyncadd [#allocation6], %s26
      %s28 = sshll.u32 [#allocation5], 4
      %s29 = int_to_ptr.vmem [resolvable:$true] %s28
      %34 = dma.hbm_to_vmem [thread:$0]  %s1, 1024, %s29, [#allocation6], 64, 64, 4
    $region9: #{_gcn_forward_jit.3} parent=1 // pred_fallthru
      _
    // Predicated region
    $region10: #{_gcn_forward_jit.3} parent=1 // pred_check
      _
    $region11: #{_gcn_forward_jit.3} parent=1 // pred_check_branch
      %36 = sbr.rel (0) target = $region13
    $region12: #{_gcn_forward_jit.3} parent=1 // pred_region
      %s38 = ssub.s32 16, 16
      %39 = vsyncadd [#allocation6], %s38
      %s41 = sshll.u32 [#allocation7], 4
      %s42 = int_to_ptr.vmem [resolvable:$true] %s41
      %44 = dma.hbm_to_vmem [thread:$0]  %s2, 16, %s42, [#allocation6]
    $region13: #{_gcn_forward_jit.3} parent=1 // pred_fallthru
      _
    // Predicated region
    $region14: #{_gcn_forward_jit.3} parent=1 // pred_check
      _
    $region15: #{_gcn_forward_jit.3} parent=1 // pred_check_branch
      %46 = sbr.rel (0) target = $region17
    $region16: #{_gcn_forward_jit.3} parent=1 // pred_region
      %47 = dma.done [#allocation3], 1024
    $region17: #{_gcn_forward_jit.3} parent=1 // pred_fallthru
      _
    // Predicated region
    $region18: #{_gcn_forward_jit.3} parent=1 // pred_check
      _
    $region19: #{_gcn_forward_jit.3} parent=1 // pred_check_branch
      %49 = sbr.rel (0) target = $region21
    $region20: #{_gcn_forward_jit.3} parent=1 // pred_region
      %50 = dma.done [#allocation6], 1024
    $region21: #{_gcn_forward_jit.3} parent=1 // pred_fallthru
      _
    // Predicated region
    $region22: #{_gcn_forward_jit.3} parent=1 // pred_check
      _
    $region23: #{_gcn_forward_jit.3} parent=1 // pred_check_branch
      %52 = sbr.rel (0) target = $region25
    $region24: #{_gcn_forward_jit.3} parent=1 // pred_region
      %53 = dma.done [#allocation6], 16
    $region25: #{_gcn_forward_jit.3} parent=1 // pred_fallthru
      _
    %p55 = scmp.eq.s32.totalorder 0, 0
    // Predicated region
    $region26: #{_gcn_forward_jit.3} parent=1 // pred_check
      %p56 = pneg %p55
    $region27: #{_gcn_forward_jit.3} parent=1 // pred_check_branch
      %58 = sbr.rel (%p56) target = $region29
    $region28: #{_gcn_forward_jit.3} parent=1 // pred_region
      %v59 = vld [vmem:[#allocation7] sm:$0x1]
      %v61 = vlaneseq
      %v62 = vshrl.u32 %v61, 7
      %v63 = vsub.s32 0, %v62
      %v64 = vrot.slane %v59, %v63
      %66 = vst [vmem:[#allocation8] sm:$0xff] %v64
      %67 = vst [vmem:[#allocation8 + $0x8] sm:$0xff] %v64
      %68 = vst [vmem:[#allocation8 + $0x10] sm:$0xff] %v64
      %69 = vst [vmem:[#allocation8 + $0x18] sm:$0xff] %v64
      %70 = vst [vmem:[#allocation8 + $0x20] sm:$0xff] %v64
      %71 = vst [vmem:[#allocation8 + $0x28] sm:$0xff] %v64
      %72 = vst [vmem:[#allocation8 + $0x30] sm:$0xff] %v64
      %73 = vst [vmem:[#allocation8 + $0x38] sm:$0xff] %v64
      %74 = vst [vmem:[#allocation8 + $0x40] sm:$0xff] %v64
      %75 = vst [vmem:[#allocation8 + $0x48] sm:$0xff] %v64
      %76 = vst [vmem:[#allocation8 + $0x50] sm:$0xff] %v64
      %77 = vst [vmem:[#allocation8 + $0x58] sm:$0xff] %v64
      %78 = vst [vmem:[#allocation8 + $0x60] sm:$0xff] %v64
      %79 = vst [vmem:[#allocation8 + $0x68] sm:$0xff] %v64
      %80 = vst [vmem:[#allocation8 + $0x70] sm:$0xff] %v64
      %81 = vst [vmem:[#allocation8 + $0x78] sm:$0xff] %v64
    $region29: #{_gcn_forward_jit.3} parent=1 // pred_fallthru
      _
    %v82 = vld [vmem:[#allocation8] sm:$0xff]
    %v83 = vld [vmem:[#allocation8 + $0x8] sm:$0xff]
    %v84 = vld [vmem:[#allocation8 + $0x10] sm:$0xff]
    %v85 = vld [vmem:[#allocation8 + $0x18] sm:$0xff]
    %v86 = vld [vmem:[#allocation8 + $0x20] sm:$0xff]
    %v87 = vld [vmem:[#allocation8 + $0x28] sm:$0xff]
    %v88 = vld [vmem:[#allocation8 + $0x30] sm:$0xff]
    %v89 = vld [vmem:[#allocation8 + $0x38] sm:$0xff]
    %v90 = vld [vmem:[#allocation8 + $0x40] sm:$0xff]
    %v91 = vld [vmem:[#allocation8 + $0x48] sm:$0xff]
    %v92 = vld [vmem:[#allocation8 + $0x50] sm:$0xff]
    %v93 = vld [vmem:[#allocation8 + $0x58] sm:$0xff]
    %v94 = vld [vmem:[#allocation8 + $0x60] sm:$0xff]
    %v95 = vld [vmem:[#allocation8 + $0x68] sm:$0xff]
    %v96 = vld [vmem:[#allocation8 + $0x70] sm:$0xff]
    %v97 = vld [vmem:[#allocation8 + $0x78] sm:$0xff]
    %v98 = vld [vmem:[#allocation2] sm:$0xf]
    %v99 = vld [vmem:[#allocation2 + $0x4] sm:$0xf]
    %v100 = vld [vmem:[#allocation2 + $0x8] sm:$0xf]
    %v101 = vld [vmem:[#allocation2 + $0xc] sm:$0xf]
    %v102 = vld [vmem:[#allocation2 + $0x10] sm:$0xf]
    %v103 = vld [vmem:[#allocation2 + $0x14] sm:$0xf]
    %v104 = vld [vmem:[#allocation2 + $0x18] sm:$0xf]
    %v105 = vld [vmem:[#allocation2 + $0x1c] sm:$0xf]
    %v106 = vld [vmem:[#allocation2 + $0x20] sm:$0xf]
    %v107 = vld [vmem:[#allocation2 + $0x24] sm:$0xf]
    %v108 = vld [vmem:[#allocation2 + $0x28] sm:$0xf]
    %v109 = vld [vmem:[#allocation2 + $0x2c] sm:$0xf]
    %v110 = vld [vmem:[#allocation2 + $0x30] sm:$0xf]
    %v111 = vld [vmem:[#allocation2 + $0x34] sm:$0xf]
    %v112 = vld [vmem:[#allocation2 + $0x38] sm:$0xf]
    %v113 = vld [vmem:[#allocation2 + $0x3c] sm:$0xf]
    %v114 = vld [vmem:[#allocation5] sm:$0xf]
    %v115 = vld [vmem:[#allocation5 + $0x4] sm:$0xf]
    %v116 = vld [vmem:[#allocation5 + $0x8] sm:$0xf]
    %v117 = vld [vmem:[#allocation5 + $0xc] sm:$0xf]
    %v118 = vld [vmem:[#allocation5 + $0x10] sm:$0xf]
    %v119 = vld [vmem:[#allocation5 + $0x14] sm:$0xf]
    %v120 = vld [vmem:[#allocation5 + $0x18] sm:$0xf]
    %v121 = vld [vmem:[#allocation5 + $0x1c] sm:$0xf]
    %v122 = vld [vmem:[#allocation5 + $0x20] sm:$0xf]
    %v123 = vld [vmem:[#allocation5 + $0x24] sm:$0xf]
    %v124 = vld [vmem:[#allocation5 + $0x28] sm:$0xf]
    %v125 = vld [vmem:[#allocation5 + $0x2c] sm:$0xf]
    %v126 = vld [vmem:[#allocation5 + $0x30] sm:$0xf]
    %v127 = vld [vmem:[#allocation5 + $0x34] sm:$0xf]
    %v128 = vld [vmem:[#allocation5 + $0x38] sm:$0xf]
    %v129 = vld [vmem:[#allocation5 + $0x3c] sm:$0xf]
    %v146 = vunpack.c.l.b16 %v98
    %v147 = vunpack.c.l.b16 %v99
    %v148 = vunpack.c.l.b16 %v100
    %v149 = vunpack.c.l.b16 %v101
    %v150 = vunpack.c.l.b16 %v102
    %v151 = vunpack.c.l.b16 %v103
    %v152 = vunpack.c.l.b16 %v104
    %v153 = vunpack.c.l.b16 %v105
    %v154 = vunpack.c.l.b16 %v106
    %v155 = vunpack.c.l.b16 %v107
    %v156 = vunpack.c.l.b16 %v108
    %v157 = vunpack.c.l.b16 %v109
    %v158 = vunpack.c.l.b16 %v110
    %v159 = vunpack.c.l.b16 %v111
    %v160 = vunpack.c.l.b16 %v112
    %v161 = vunpack.c.l.b16 %v113
    %v162 = vpack.c.b16 %v147, %v146
    %v163 = vpack.c.b16 %v149, %v148
    %v164 = vpack.c.b16 %v151, %v150
    %v165 = vpack.c.b16 %v153, %v152
    %v166 = vpack.c.b16 %v155, %v154
    %v167 = vpack.c.b16 %v157, %v156
    %v168 = vpack.c.b16 %v159, %v158
    %v169 = vpack.c.b16 %v161, %v160
    %v194 = vunpack.c.l.b16 %v114
    %v195 = vunpack.c.l.b16 %v115
    %v196 = vunpack.c.l.b16 %v116
    %v197 = vunpack.c.l.b16 %v117
    %v198 = vunpack.c.l.b16 %v118
    %v199 = vunpack.c.l.b16 %v119
    %v200 = vunpack.c.l.b16 %v120
    %v201 = vunpack.c.l.b16 %v121
    %v202 = vunpack.c.l.b16 %v122
    %v203 = vunpack.c.l.b16 %v123
    %v204 = vunpack.c.l.b16 %v124
    %v205 = vunpack.c.l.b16 %v125
    %v206 = vunpack.c.l.b16 %v126
    %v207 = vunpack.c.l.b16 %v127
    %v208 = vunpack.c.l.b16 %v128
    %v209 = vunpack.c.l.b16 %v129
    %v210 = vpack.c.b16 %v195, %v194
    %v211 = vpack.c.b16 %v197, %v196
    %v212 = vpack.c.b16 %v199, %v198
    %v213 = vpack.c.b16 %v201, %v200
    %v214 = vpack.c.b16 %v203, %v202
    %v215 = vpack.c.b16 %v205, %v204
    %v216 = vpack.c.b16 %v207, %v206
    %v217 = vpack.c.b16 %v209, %v208
    %226 = vmatprep.subr.bf16.mxu0 0
    %227 = vmatpush1.bf16.msra.mxu0 %v210
    %228 = vmatprep.subr.bf16.mxu0 0
    %229 = vmatpush1.bf16.msra.mxu0 %v211
    %230 = vmatprep.subr.bf16.mxu0 0
    %231 = vmatpush1.bf16.msra.mxu0 %v212
    %232 = vmatprep.subr.bf16.mxu0 0
    %233 = vmatpush1.bf16.msra.mxu0 %v213
    %234 = vmatprep.subr.bf16.mxu0 0
    %235 = vmatpush1.bf16.msra.mxu0 %v214
    %236 = vmatprep.subr.bf16.mxu0 0
    %237 = vmatpush1.bf16.msra.mxu0 %v215
    %238 = vmatprep.subr.bf16.mxu0 0
    %239 = vmatpush1.bf16.msra.mxu0 %v216
    %240 = vmatprep.subr.bf16.mxu0 0
    %241 = vmatpush1.bf16.msra.mxu0 %v217
    %242 = vmatprep.subr.bf16.mxu0 0
    %243 = vmatpush1.bf16.msra.mxu0 0
    %244 = vmatprep.subr.bf16.mxu0 0
    %245 = vmatpush1.bf16.msra.mxu0 0
    %246 = vmatprep.subr.bf16.mxu0 0
    %247 = vmatpush1.bf16.msra.mxu0 0
    %248 = vmatprep.subr.bf16.mxu0 0
    %249 = vmatpush1.bf16.msra.mxu0 0
    %250 = vmatprep.subr.bf16.mxu0 0
    %251 = vmatpush1.bf16.msra.mxu0 0
    %252 = vmatprep.subr.bf16.mxu0 0
    %253 = vmatpush1.bf16.msra.mxu0 0
    %254 = vmatprep.subr.bf16.mxu0 0
    %255 = vmatpush1.bf16.msra.mxu0 0
    %256 = vmatprep.subr.bf16.mxu0 0
    %257 = vmatpush1.bf16.msra.mxu0 0
    %258 = vmatprep.mubr.bf16.mxu0 0
    %259 = vmatmul.mubr.bf16.gmra.mrb[0].mxu0 %v162
    %v260 = vpop.f32.mrb[0].mxu0
    %v261 = vadd.f32 0.0, %v260
    %v262 = vpop.f32.mrb[0].mxu0
    %v263 = vpop.f32.mrb[0].mxu0
    %v264 = vadd.f32 0.0, %v263
    %v265 = vpop.f32.mrb[0].mxu0
    %266 = vmatprep.mubr.bf16.mxu0 0
    %267 = vmatmul.mubr.bf16.gmra.mrb[0].mxu0 %v163
    %v268 = vpop.f32.mrb[0].mxu0
    %v269 = vadd.f32 0.0, %v268
    %v270 = vpop.f32.mrb[0].mxu0
    %v271 = vpop.f32.mrb[0].mxu0
    %v272 = vadd.f32 0.0, %v271
    %v273 = vpop.f32.mrb[0].mxu0
    %274 = vmatprep.mubr.bf16.mxu0 0
    %275 = vmatmul.mubr.bf16.gmra.mrb[0].mxu0 %v164
    %v276 = vpop.f32.mrb[0].mxu0
    %v277 = vadd.f32 0.0, %v276
    %v278 = vpop.f32.mrb[0].mxu0
    %v279 = vpop.f32.mrb[0].mxu0
    %v280 = vadd.f32 0.0, %v279
    %v281 = vpop.f32.mrb[0].mxu0
    %282 = vmatprep.mubr.bf16.mxu0 0
    %283 = vmatmul.mubr.bf16.gmra.mrb[0].mxu0 %v165
    %v284 = vpop.f32.mrb[0].mxu0
    %v285 = vadd.f32 0.0, %v284
    %v286 = vpop.f32.mrb[0].mxu0
    %v287 = vpop.f32.mrb[0].mxu0
    %v288 = vadd.f32 0.0, %v287
    %v289 = vpop.f32.mrb[0].mxu0
    %290 = vmatprep.mubr.bf16.mxu0 0
    %291 = vmatmul.mubr.bf16.gmra.mrb[0].mxu0 %v166
    %v292 = vpop.f32.mrb[0].mxu0
    %v293 = vadd.f32 0.0, %v292
    %v294 = vpop.f32.mrb[0].mxu0
    %v295 = vpop.f32.mrb[0].mxu0
    %v296 = vadd.f32 0.0, %v295
    %v297 = vpop.f32.mrb[0].mxu0
    %298 = vmatprep.mubr.bf16.mxu0 0
    %299 = vmatmul.mubr.bf16.gmra.mrb[0].mxu0 %v167
    %v300 = vpop.f32.mrb[0].mxu0
    %v301 = vadd.f32 0.0, %v300
    %v302 = vpop.f32.mrb[0].mxu0
    %v303 = vpop.f32.mrb[0].mxu0
    %v304 = vadd.f32 0.0, %v303
    %v305 = vpop.f32.mrb[0].mxu0
    %306 = vmatprep.mubr.bf16.mxu0 0
    %307 = vmatmul.mubr.bf16.gmra.mrb[0].mxu0 %v168
    %v308 = vpop.f32.mrb[0].mxu0
    %v309 = vadd.f32 0.0, %v308
    %v310 = vpop.f32.mrb[0].mxu0
    %v311 = vpop.f32.mrb[0].mxu0
    %v312 = vadd.f32 0.0, %v311
    %v313 = vpop.f32.mrb[0].mxu0
    %314 = vmatprep.mubr.bf16.mxu0 0
    %315 = vmatmul.mubr.bf16.gmra.mrb[0].mxu0 %v169
    %v316 = vpop.f32.mrb[0].mxu0
    %v317 = vadd.f32 0.0, %v316
    %v318 = vpop.f32.mrb[0].mxu0
    %v319 = vpop.f32.mrb[0].mxu0
    %v320 = vadd.f32 0.0, %v319
    %v321 = vpop.f32.mrb[0].mxu0
    %322 = vdwg.mxu0
    %v323 = vadd.f32 %v82, %v261
    %v324 = vadd.f32 %v83, %v264
    %v325 = vadd.f32 %v84, %v269
    %v326 = vadd.f32 %v85, %v272
    %v327 = vadd.f32 %v86, %v277
    %v328 = vadd.f32 %v87, %v280
    %v329 = vadd.f32 %v88, %v285
    %v330 = vadd.f32 %v89, %v288
    %v331 = vadd.f32 %v90, %v293
    %v332 = vadd.f32 %v91, %v296
    %v333 = vadd.f32 %v92, %v301
    %v334 = vadd.f32 %v93, %v304
    %v335 = vadd.f32 %v94, %v309
    %v336 = vadd.f32 %v95, %v312
    %v337 = vadd.f32 %v96, %v317
    %v338 = vadd.f32 %v97, %v320
    %339 = vst [vmem:[#allocation8] sm:$0xff] %v323
    %340 = vst [vmem:[#allocation8 + $0x8] sm:$0xff] %v324
    %341 = vst [vmem:[#allocation8 + $0x10] sm:$0xff] %v325
    %342 = vst [vmem:[#allocation8 + $0x18] sm:$0xff] %v326
    %343 = vst [vmem:[#allocation8 + $0x20] sm:$0xff] %v327
    %344 = vst [vmem:[#allocation8 + $0x28] sm:$0xff] %v328
    %345 = vst [vmem:[#allocation8 + $0x30] sm:$0xff] %v329
    %346 = vst [vmem:[#allocation8 + $0x38] sm:$0xff] %v330
    %347 = vst [vmem:[#allocation8 + $0x40] sm:$0xff] %v331
    %348 = vst [vmem:[#allocation8 + $0x48] sm:$0xff] %v332
    %349 = vst [vmem:[#allocation8 + $0x50] sm:$0xff] %v333
    %350 = vst [vmem:[#allocation8 + $0x58] sm:$0xff] %v334
    %351 = vst [vmem:[#allocation8 + $0x60] sm:$0xff] %v335
    %352 = vst [vmem:[#allocation8 + $0x68] sm:$0xff] %v336
    %353 = vst [vmem:[#allocation8 + $0x70] sm:$0xff] %v337
    %354 = vst [vmem:[#allocation8 + $0x78] sm:$0xff] %v338
    // Predicated region
    $region30: #{_gcn_forward_jit.3} parent=1 // pred_check
      _
    $region31: #{_gcn_forward_jit.3} parent=1 // pred_check_branch
      %356 = sbr.rel (0) target = $region33
    $region32: #{_gcn_forward_jit.3} parent=1 // pred_region
      %s358 = ssub.s32 2048, 2048
      %359 = vsyncadd [#allocation4], %s358
      %s360 = sshll.u32 [#allocation8], 4
      %s361 = int_to_ptr.vmem [resolvable:$true] %s360
      %366 = dma.vmem_to_hbm [thread:$0]  %s361, 2048, %s3, [#allocation4], 128, 128, 8
    $region33: #{_gcn_forward_jit.3} parent=1 // pred_fallthru
      _
    // Predicated region
    $region34: #{_gcn_forward_jit.3} parent=1 // pred_check
      _
    $region35: #{_gcn_forward_jit.3} parent=1 // pred_check_branch
      %368 = sbr.rel (0) target = $region37
    $region36: #{_gcn_forward_jit.3} parent=1 // pred_region
      %369 = dma.done [#allocation4], 2048
    $region37: #{_gcn_forward_jit.3} parent=1 // pred_fallthru
      _
    %370 = vsyncpa [#allocation3], 1
    %371 = vsyncpa [#allocation6], 1
    %372 = vsyncpa [#allocation4], 1

// kernel: _gcn_forward_jit.2
$region0: #{_gcn_forward_jit.2}
  #allocation0 [shape = 'u32[]', space=smem, size = 0x4, offset = 0x4, fixed_abs, tag = 'smem constant byte address 0x4 - core index']
  #allocation1 [shape = 'u32[144,128]{1,0:T(1,128)}', space=vmem, size = 0x12000, scoped, tag = 'internal scratch']
  %s0 = inlined_call_operand.hbm [shape: bf16[128,16], index: 0, kind: input, shape index: {}]
  %s1 = inlined_call_operand.hbm [shape: bf16[16,128], index: 1, kind: input, shape index: {}]
  %s2 = inlined_call_operand.hbm [shape: bf16[128,128], index: 2, kind: output, shape index: {}]
  %s3 = sld [smem:[#allocation0]]
  $region26: #{_gcn_forward_jit.2} parent=0
    _
  %s5 = ssub.s32 1, %s3
  %s6 = scalar_select 0, %s5, %s3
  $region1: #{_gcn_forward_jit.2} parent=0
    #allocation2 [shape = 'u8[32768]{0}', space=vmem, size = 0x8000, scoped, tag = 'input window, operand 0, single buffered']
    #allocation3 [shape = 's32[1]{0}', space=sflag, size = 0x4, scoped, tag = 'scoped memory for _gcn_forward_jit.2']
    #allocation4 [shape = 's32[1]{0}', space=sflag, size = 0x4, scoped, tag = 'scoped memory for _gcn_forward_jit.2']
    #allocation5 [shape = 'u8[4096]{0}', space=vmem, size = 0x1000, scoped, tag = 'input window, operand 1, single buffered']
    #allocation6 [shape = 's32[1]{0}', space=sflag, size = 0x4, scoped, tag = 'scoped memory for _gcn_forward_jit.2']
    #allocation7 [shape = 'u8[32768]{0}', space=vmem, size = 0x8000, scoped, tag = 'output window, operand 0, single buffered']
    %7 = vsyncpa [#allocation3], 0
    %8 = vsyncpa [#allocation6], 0
    %9 = vsyncpa [#allocation4], 0
    // Predicated region
    $region2: #{_gcn_forward_jit.2} parent=1 // pred_check
      _
    $region3: #{_gcn_forward_jit.2} parent=1 // pred_check_branch
      %11 = sbr.rel (0) target = $region5
    $region4: #{_gcn_forward_jit.2} parent=1 // pred_region
      %s13 = ssub.s32 1024, 1024
      %14 = vsyncadd [#allocation3], %s13
      %s15 = sshll.u32 [#allocation2], 4
      %s16 = int_to_ptr.vmem [resolvable:$true] %s15
      %21 = dma.hbm_to_vmem [thread:$0]  %s0, 1024, %s16, [#allocation3], 64, 64, 4
    $region5: #{_gcn_forward_jit.2} parent=1 // pred_fallthru
      _
    // Predicated region
    $region6: #{_gcn_forward_jit.2} parent=1 // pred_check
      _
    $region7: #{_gcn_forward_jit.2} parent=1 // pred_check_branch
      %23 = sbr.rel (0) target = $region9
    $region8: #{_gcn_forward_jit.2} parent=1 // pred_region
      %s25 = ssub.s32 128, 128
      %26 = vsyncadd [#allocation6], %s25
      %s27 = sshll.u32 [#allocation5], 4
      %s28 = int_to_ptr.vmem [resolvable:$true] %s27
      %33 = dma.hbm_to_vmem [thread:$0]  %s1, 128, %s28, [#allocation6], 64, 64, 4
    $region9: #{_gcn_forward_jit.2} parent=1 // pred_fallthru
      _
    // Predicated region
    $region10: #{_gcn_forward_jit.2} parent=1 // pred_check
      _
    $region11: #{_gcn_forward_jit.2} parent=1 // pred_check_branch
      %35 = sbr.rel (0) target = $region13
    $region12: #{_gcn_forward_jit.2} parent=1 // pred_region
      %36 = dma.done [#allocation3], 1024
    $region13: #{_gcn_forward_jit.2} parent=1 // pred_fallthru
      _
    // Predicated region
    $region14: #{_gcn_forward_jit.2} parent=1 // pred_check
      _
    $region15: #{_gcn_forward_jit.2} parent=1 // pred_check_branch
      %38 = sbr.rel (0) target = $region17
    $region16: #{_gcn_forward_jit.2} parent=1 // pred_region
      %39 = dma.done [#allocation6], 128
    $region17: #{_gcn_forward_jit.2} parent=1 // pred_fallthru
      _
    %v41 = vld [vmem:[#allocation2] sm:$0xf]
    %v42 = vld [vmem:[#allocation2 + $0x4] sm:$0xf]
    %v43 = vld [vmem:[#allocation2 + $0x8] sm:$0xf]
    %v44 = vld [vmem:[#allocation2 + $0xc] sm:$0xf]
    %v45 = vld [vmem:[#allocation2 + $0x10] sm:$0xf]
    %v46 = vld [vmem:[#allocation2 + $0x14] sm:$0xf]
    %v47 = vld [vmem:[#allocation2 + $0x18] sm:$0xf]
    %v48 = vld [vmem:[#allocation2 + $0x1c] sm:$0xf]
    %v49 = vld [vmem:[#allocation2 + $0x20] sm:$0xf]
    %v50 = vld [vmem:[#allocation2 + $0x24] sm:$0xf]
    %v51 = vld [vmem:[#allocation2 + $0x28] sm:$0xf]
    %v52 = vld [vmem:[#allocation2 + $0x2c] sm:$0xf]
    %v53 = vld [vmem:[#allocation2 + $0x30] sm:$0xf]
    %v54 = vld [vmem:[#allocation2 + $0x34] sm:$0xf]
    %v55 = vld [vmem:[#allocation2 + $0x38] sm:$0xf]
    %v56 = vld [vmem:[#allocation2 + $0x3c] sm:$0xf]
    %v57 = vld [vmem:[#allocation5] sm:$0xf]
    %v58 = vld [vmem:[#allocation5 + $0x4] sm:$0xf]
    %v75 = vunpack.c.l.b16 %v41
    %v76 = vunpack.c.l.b16 %v42
    %v77 = vunpack.c.l.b16 %v43
    %v78 = vunpack.c.l.b16 %v44
    %v79 = vunpack.c.l.b16 %v45
    %v80 = vunpack.c.l.b16 %v46
    %v81 = vunpack.c.l.b16 %v47
    %v82 = vunpack.c.l.b16 %v48
    %v83 = vunpack.c.l.b16 %v49
    %v84 = vunpack.c.l.b16 %v50
    %v85 = vunpack.c.l.b16 %v51
    %v86 = vunpack.c.l.b16 %v52
    %v87 = vunpack.c.l.b16 %v53
    %v88 = vunpack.c.l.b16 %v54
    %v89 = vunpack.c.l.b16 %v55
    %v90 = vunpack.c.l.b16 %v56
    %v91 = vpack.c.b16 %v76, %v75
    %v92 = vpack.c.b16 %v78, %v77
    %v93 = vpack.c.b16 %v80, %v79
    %v94 = vpack.c.b16 %v82, %v81
    %v95 = vpack.c.b16 %v84, %v83
    %v96 = vpack.c.b16 %v86, %v85
    %v97 = vpack.c.b16 %v88, %v87
    %v98 = vpack.c.b16 %v90, %v89
    %v101 = vunpack.c.l.b16 %v57
    %v102 = vunpack.c.l.b16 %v58
    %v103 = vpack.c.b16 %v102, %v101
    %vm105 = vcmask 130048
    %v107 = vsel %vm105, %v91, 0
    %v110 = vsel %vm105, %v92, 0
    %v113 = vsel %vm105, %v93, 0
    %v116 = vsel %vm105, %v94, 0
    %v119 = vsel %vm105, %v95, 0
    %v122 = vsel %vm105, %v96, 0
    %v125 = vsel %vm105, %v97, 0
    %v128 = vsel %vm105, %v98, 0
    %130 = vmatprep.subr.bf16.mxu0 0
    %131 = vmatpush1.bf16.msra.mxu0 %v103
    %132 = vmatprep.subr.bf16.mxu0 0
    %133 = vmatpush1.bf16.msra.mxu0 0
    %134 = vmatprep.subr.bf16.mxu0 0
    %135 = vmatpush1.bf16.msra.mxu0 0
    %136 = vmatprep.subr.bf16.mxu0 0
    %137 = vmatpush1.bf16.msra.mxu0 0
    %138 = vmatprep.subr.bf16.mxu0 0
    %139 = vmatpush1.bf16.msra.mxu0 0
    %140 = vmatprep.subr.bf16.mxu0 0
    %141 = vmatpush1.bf16.msra.mxu0 0
    %142 = vmatprep.subr.bf16.mxu0 0
    %143 = vmatpush1.bf16.msra.mxu0 0
    %144 = vmatprep.subr.bf16.mxu0 0
    %145 = vmatpush1.bf16.msra.mxu0 0
    %146 = vmatprep.subr.bf16.mxu0 0
    %147 = vmatpush1.bf16.msra.mxu0 0
    %148 = vmatprep.subr.bf16.mxu0 0
    %149 = vmatpush1.bf16.msra.mxu0 0
    %150 = vmatprep.subr.bf16.mxu0 0
    %151 = vmatpush1.bf16.msra.mxu0 0
    %152 = vmatprep.subr.bf16.mxu0 0
    %153 = vmatpush1.bf16.msra.mxu0 0
    %154 = vmatprep.subr.bf16.mxu0 0
    %155 = vmatpush1.bf16.msra.mxu0 0
    %156 = vmatprep.subr.bf16.mxu0 0
    %157 = vmatpush1.bf16.msra.mxu0 0
    %158 = vmatprep.subr.bf16.mxu0 0
    %159 = vmatpush1.bf16.msra.mxu0 0
    %160 = vmatprep.subr.bf16.mxu0 0
    %161 = vmatpush1.bf16.msra.mxu0 0
    %162 = vmatprep.mubr.bf16.mxu0 0
    %163 = vmatmul.mubr.bf16.gmra.mrb[0].mxu0 %v107
    %v164 = vpop.f32.mrb[0].mxu0
    %v165 = vadd.f32 0.0, %v164
    %v166 = vpop.f32.mrb[0].mxu0
    %v167 = vpop.f32.mrb[0].mxu0
    %v168 = vadd.f32 0.0, %v167
    %v169 = vpop.f32.mrb[0].mxu0
    %170 = vmatprep.mubr.bf16.mxu0 0
    %171 = vmatmul.mubr.bf16.gmra.mrb[0].mxu0 %v110
    %v172 = vpop.f32.mrb[0].mxu0
    %v173 = vadd.f32 0.0, %v172
    %v174 = vpop.f32.mrb[0].mxu0
    %v175 = vpop.f32.mrb[0].mxu0
    %v176 = vadd.f32 0.0, %v175
    %v177 = vpop.f32.mrb[0].mxu0
    %178 = vmatprep.mubr.bf16.mxu0 0
    %179 = vmatmul.mubr.bf16.gmra.mrb[0].mxu0 %v113
    %v180 = vpop.f32.mrb[0].mxu0
    %v181 = vadd.f32 0.0, %v180
    %v182 = vpop.f32.mrb[0].mxu0
    %v183 = vpop.f32.mrb[0].mxu0
    %v184 = vadd.f32 0.0, %v183
    %v185 = vpop.f32.mrb[0].mxu0
    %186 = vmatprep.mubr.bf16.mxu0 0
    %187 = vmatmul.mubr.bf16.gmra.mrb[0].mxu0 %v116
    %v188 = vpop.f32.mrb[0].mxu0
    %v189 = vadd.f32 0.0, %v188
    %v190 = vpop.f32.mrb[0].mxu0
    %v191 = vpop.f32.mrb[0].mxu0
    %v192 = vadd.f32 0.0, %v191
    %v193 = vpop.f32.mrb[0].mxu0
    %194 = vmatprep.mubr.bf16.mxu0 0
    %195 = vmatmul.mubr.bf16.gmra.mrb[0].mxu0 %v119
    %v196 = vpop.f32.mrb[0].mxu0
    %v197 = vadd.f32 0.0, %v196
    %v198 = vpop.f32.mrb[0].mxu0
    %v199 = vpop.f32.mrb[0].mxu0
    %v200 = vadd.f32 0.0, %v199
    %v201 = vpop.f32.mrb[0].mxu0
    %202 = vmatprep.mubr.bf16.mxu0 0
    %203 = vmatmul.mubr.bf16.gmra.mrb[0].mxu0 %v122
    %v204 = vpop.f32.mrb[0].mxu0
    %v205 = vadd.f32 0.0, %v204
    %v206 = vpop.f32.mrb[0].mxu0
    %v207 = vpop.f32.mrb[0].mxu0
    %v208 = vadd.f32 0.0, %v207
    %v209 = vpop.f32.mrb[0].mxu0
    %210 = vmatprep.mubr.bf16.mxu0 0
    %211 = vmatmul.mubr.bf16.gmra.mrb[0].mxu0 %v125
    %v212 = vpop.f32.mrb[0].mxu0
    %v213 = vadd.f32 0.0, %v212
    %v214 = vpop.f32.mrb[0].mxu0
    %v215 = vpop.f32.mrb[0].mxu0
    %v216 = vadd.f32 0.0, %v215
    %v217 = vpop.f32.mrb[0].mxu0
    %218 = vmatprep.mubr.bf16.mxu0 0
    %219 = vmatmul.mubr.bf16.gmra.mrb[0].mxu0 %v128
    %v220 = vpop.f32.mrb[0].mxu0
    %v221 = vadd.f32 0.0, %v220
    %v222 = vpop.f32.mrb[0].mxu0
    %v223 = vpop.f32.mrb[0].mxu0
    %v224 = vadd.f32 0.0, %v223
    %v225 = vpop.f32.mrb[0].mxu0
    %226 = vdwg.mxu0
    %v227 = vpack.c.bf16 %v168, %v165
    %v228 = vpack.c.bf16 %v176, %v173
    %v229 = vpack.c.bf16 %v184, %v181
    %v230 = vpack.c.bf16 %v192, %v189
    %v231 = vpack.c.bf16 %v200, %v197
    %v232 = vpack.c.bf16 %v208, %v205
    %v233 = vpack.c.bf16 %v216, %v213
    %v234 = vpack.c.bf16 %v224, %v221
    %v243 = vunpack.c.l.b16 %v227
    %v244 = vunpack.c.h.b16 %v227
    %v245 = vunpack.c.l.b16 %v228
    %v246 = vunpack.c.h.b16 %v228
    %v247 = vunpack.c.l.b16 %v229
    %v248 = vunpack.c.h.b16 %v229
    %v249 = vunpack.c.l.b16 %v230
    %v250 = vunpack.c.h.b16 %v230
    %v251 = vunpack.c.l.b16 %v231
    %v252 = vunpack.c.h.b16 %v231
    %v253 = vunpack.c.l.b16 %v232
    %v254 = vunpack.c.h.b16 %v232
    %v255 = vunpack.c.l.b16 %v233
    %v256 = vunpack.c.h.b16 %v233
    %v257 = vunpack.c.l.b16 %v234
    %v258 = vunpack.c.h.b16 %v234
    %v259 = vpack.c.b16 %v243, %v243
    %v260 = vpack.c.b16 %v244, %v244
    %v261 = vpack.c.b16 %v245, %v245
    %v262 = vpack.c.b16 %v246, %v246
    %v263 = vpack.c.b16 %v247, %v247
    %v264 = vpack.c.b16 %v248, %v248
    %v265 = vpack.c.b16 %v249, %v249
    %v266 = vpack.c.b16 %v250, %v250
    %v267 = vpack.c.b16 %v251, %v251
    %v268 = vpack.c.b16 %v252, %v252
    %v269 = vpack.c.b16 %v253, %v253
    %v270 = vpack.c.b16 %v254, %v254
    %v271 = vpack.c.b16 %v255, %v255
    %v272 = vpack.c.b16 %v256, %v256
    %v273 = vpack.c.b16 %v257, %v257
    %v274 = vpack.c.b16 %v258, %v258
    %291 = vst [vmem:[#allocation7] sm:$0xf] %v259
    %292 = vst [vmem:[#allocation7 + $0x4] sm:$0xf] %v260
    %293 = vst [vmem:[#allocation7 + $0x8] sm:$0xf] %v261
    %294 = vst [vmem:[#allocation7 + $0xc] sm:$0xf] %v262
    %295 = vst [vmem:[#allocation7 + $0x10] sm:$0xf] %v263
    %296 = vst [vmem:[#allocation7 + $0x14] sm:$0xf] %v264
    %297 = vst [vmem:[#allocation7 + $0x18] sm:$0xf] %v265
    %298 = vst [vmem:[#allocation7 + $0x1c] sm:$0xf] %v266
    %299 = vst [vmem:[#allocation7 + $0x20] sm:$0xf] %v267
    %300 = vst [vmem:[#allocation7 + $0x24] sm:$0xf] %v268
    %301 = vst [vmem:[#allocation7 + $0x28] sm:$0xf] %v269
    %302 = vst [vmem:[#allocation7 + $0x2c] sm:$0xf] %v270
    %303 = vst [vmem:[#allocation7 + $0x30] sm:$0xf] %v271
    %304 = vst [vmem:[#allocation7 + $0x34] sm:$0xf] %v272
    %305 = vst [vmem:[#allocation7 + $0x38] sm:$0xf] %v273
    %306 = vst [vmem:[#allocation7 + $0x3c] sm:$0xf] %v274
    // Predicated region
    $region18: #{_gcn_forward_jit.2} parent=1 // pred_check
      _
    $region19: #{_gcn_forward_jit.2} parent=1 // pred_check_branch
      %308 = sbr.rel (0) target = $region21
    $region20: #{_gcn_forward_jit.2} parent=1 // pred_region
      %s310 = ssub.s32 1024, 1024
      %311 = vsyncadd [#allocation4], %s310
      %s312 = sshll.u32 [#allocation7], 4
      %s313 = int_to_ptr.vmem [resolvable:$true] %s312
      %318 = dma.vmem_to_hbm [thread:$0]  %s313, 1024, %s2, [#allocation4], 64, 64, 4
    $region21: #{_gcn_forward_jit.2} parent=1 // pred_fallthru
      _
    // Predicated region
    $region22: #{_gcn_forward_jit.2} parent=1 // pred_check
      _
    $region23: #{_gcn_forward_jit.2} parent=1 // pred_check_branch
      %320 = sbr.rel (0) target = $region25
    $region24: #{_gcn_forward_jit.2} parent=1 // pred_region
      %321 = dma.done [#allocation4], 1024
    $region25: #{_gcn_forward_jit.2} parent=1 // pred_fallthru
      _
    %322 = vsyncpa [#allocation3], 1
    %323 = vsyncpa [#allocation6], 1
    %324 = vsyncpa [#allocation4], 1

</llo_original>
